<compile_context>
chip_gen: v7x
topology: tpu7x:2x2x1
jax: 0.10.0
libtpu: 0.0.40
codegen_flags: <defaults>
</compile_context>

<pallas_src>
import functools

import jax
import jax.numpy as jnp
from jax.experimental import pallas as pl
from jax.experimental.pallas import tpu as pltpu


def _round_up(a, b):
    return (a + b - 1) // b * b


def _ffn_kernel(x_ref, w1_ref, w2_ref, o_ref, acc_ref):
    # x_ref  : (tm, N_p)   bf16 input rows
    # w1_ref : (N_p, th)   bf16 W1 hidden-block
    # w2_ref : (th, N_p)   bf16 W2 hidden-block
    # o_ref  : (tm, N_p)   output tile (x.dtype)
    # acc_ref: (tm, N_p)   f32 accumulator (persists across the k axis)
    k = pl.program_id(1)

    @pl.when(k == 0)
    def _():
        acc_ref[...] = jnp.zeros_like(acc_ref)

    # First matmul on the MXU: bf16 inputs, f32 accumulate.
    h = jnp.dot(x_ref[...], w1_ref[...], preferred_element_type=jnp.float32)
    # relu(.)^2 in f32; columnwise, so blocking the hidden dim is exact.
    h = jnp.maximum(h, 0.0)
    h = h * h
    # Second matmul: downcast squared activations to bf16, accumulate in f32.
    acc_ref[...] += jnp.dot(h.astype(w2_ref.dtype), w2_ref[...],
                            preferred_element_type=jnp.float32)

    @pl.when(k == pl.num_programs(1) - 1)
    def _():
        o_ref[...] = acc_ref[...].astype(o_ref.dtype)


@functools.partial(jax.jit, static_argnames=("tm", "th"))
def feed_forward(x, w1, w2, *, tm=256, th=512):
    """x: [B, T, n_embed]; w1: [n_embed, 4*n_embed]; w2: [4*n_embed, n_embed]."""
    B, T, N = x.shape
    H = w1.shape[1]
    M = B * T

    # ---- padded / tiled sizes -------------------------------------------
    N_p = _round_up(N, 128)                    # lane-dense output (no vst.msk)
    th_eff = min(th, _round_up(H, 256))        # MXU-friendly contraction tile
    H_p = _round_up(H, th_eff)
    tm_eff = min(tm, _round_up(M, 128))        # don't over-pad tiny M
    M_p = _round_up(M, tm_eff)

    # ---- cast to bf16 and zero-pad (zero pads contribute exactly 0) ------
    cdt = jnp.bfloat16
    x2d = jnp.pad(x.reshape(M, N).astype(cdt), ((0, M_p - M), (0, N_p - N)))
    w1_p = jnp.pad(w1.astype(cdt), ((0, N_p - N), (0, H_p - H)))
    w2_p = jnp.pad(w2.astype(cdt), ((0, H_p - H), (0, N_p - N)))

    grid = (M_p // tm_eff, H_p // th_eff)

    cost = pl.CostEstimate(
        flops=4 * M_p * N_p * H_p,             # two matmuls, 2*M*N*H each
        transcendentals=0,
        bytes_accessed=(x2d.size + w1_p.size + w2_p.size) * 2
        + M_p * N_p * x.dtype.itemsize,
    )

    out2d = pl.pallas_call(
        _ffn_kernel,
        out_shape=jax.ShapeDtypeStruct((M_p, N_p), x.dtype),
        grid_spec=pltpu.PrefetchScalarGridSpec(
            num_scalar_prefetch=0,
            grid=grid,
            in_specs=[
                pl.BlockSpec((tm_eff, N_p), lambda i, k: (i, 0)),   # x rows
                pl.BlockSpec((N_p, th_eff), lambda i, k: (0, k)),   # W1 block
                pl.BlockSpec((th_eff, N_p), lambda i, k: (k, 0)),   # W2 block
            ],
            out_specs=pl.BlockSpec((tm_eff, N_p), lambda i, k: (i, 0)),
            scratch_shapes=[pltpu.VMEM((tm_eff, N_p), jnp.float32)],
        ),
        compiler_params=pltpu.CompilerParams(
            dimension_semantics=("parallel", "arbitrary"),
            vmem_limit_bytes=48 * 1024 * 1024,   # fits v7x's 64 MiB with headroom
        ),
        cost_estimate=cost,
    )(x2d, w1_p, w2_p)

    return out2d[:M, :N].reshape(B, T, N)


if __name__ == "__main__":
    # Small shapes consistent with the module: batch=2, seq=8, n_embed=32.
    B, T, n_embed = 2, 8, 32
    hidden = 4 * n_embed

    key = jax.random.PRNGKey(0)
    kx, k1, k2 = jax.random.split(key, 3)

    x = jax.random.normal(kx, (B, T, n_embed), dtype=jnp.float32)
    # Deterministic "Linear(bias=False)" weights, stored as [in, out]
    # (transpose of PyTorch's [out, in] convention), 1/sqrt(fan_in) scale.
    w1 = jax.random.normal(k1, (n_embed, hidden), dtype=jnp.float32) / jnp.sqrt(n_embed)
    w2 = jax.random.normal(k2, (hidden, n_embed), dtype=jnp.float32) / jnp.sqrt(hidden)

    out = feed_forward(x, w1, w2)
    out = jax.block_until_ready(out)
    assert out.shape == (B, T, n_embed)

    # Reference at matching (bf16-in, f32-accumulate) precision.
    xb, w1b, w2b = (a.astype(jnp.bfloat16) for a in (x, w1, w2))
    h_ref = jnp.maximum(jnp.dot(xb, w1b, preferred_element_type=jnp.float32), 0.0) ** 2
    ref_bf16 = jnp.dot(h_ref.astype(jnp.bfloat16), w2b,
                       preferred_element_type=jnp.float32).astype(x.dtype)
    assert jnp.allclose(out, ref_bf16, atol=1e-2, rtol=1e-2), float(
        jnp.max(jnp.abs(out - ref_bf16)))

    # Loose check against the full-f32 forward-pass semantics.
    ref_f32 = jnp.maximum(x @ w1, 0.0) ** 2 @ w2
    assert jnp.allclose(out, ref_f32, atol=1e-1, rtol=1e-1)

    print("KERNEL_OK")
</pallas_src>

<mosaic_0001>
module attributes {stable_mosaic.version = 11 : i64} {
  func.func @_ffn_kernel(%arg0: i32, %arg1: i32, %arg2: memref<128x128xbf16, #tpu.memory_space<vmem>>, %arg3: memref<128x256xbf16, #tpu.memory_space<vmem>>, %arg4: memref<256x128xbf16, #tpu.memory_space<vmem>>, %arg5: memref<128x128xf32, #tpu.memory_space<vmem>>, %arg6: memref<128x128xf32, #tpu.memory_space<vmem>>) attributes {dimension_semantics = [#tpu.dimension_semantics<parallel>, #tpu.dimension_semantics<arbitrary>], iteration_bounds = array<i64: 1, 1>, scalar_prefetch = 0 : i64, scratch_operands = 1 : i64, tpu.core_type = #tpu.core_type<tc>, window_params = [{transform_indices = @transform_0, window_bounds = array<i64: 128, 128>}, {transform_indices = @transform_1, window_bounds = array<i64: 128, 256>}, {transform_indices = @transform_2, window_bounds = array<i64: 256, 128>}, {transform_indices = @transform_3, window_bounds = array<i64: 128, 128>}]} {
    %c0_i32 = arith.constant 0 : i32
    %0 = arith.cmpi eq, %arg1, %c0_i32 : i32
    %1 = arith.extui %0 : i1 to i32
    %c0_i32_0 = arith.constant 0 : i32
    %2 = arith.cmpi ne, %1, %c0_i32_0 : i32
    scf.if %2 {
      %cst_14 = arith.constant 0.000000e+00 : f32
      %18 = vector.broadcast %cst_14 : f32 to vector<128x128xf32>
      %c0_15 = arith.constant 0 : index
      %c0_16 = arith.constant 0 : index
      %19 = vector.load %arg6[%c0_15, %c0_16] : memref<128x128xf32, #tpu.memory_space<vmem>>, vector<128x128xf32>
      tpu.vector_store %arg6[%c0_15, %c0_16], %18 {strides = array<i32>} : memref<128x128xf32, #tpu.memory_space<vmem>>, vector<128x128xf32>,
    } else {
    }
    %c0 = arith.constant 0 : index
    %c0_1 = arith.constant 0 : index
    %3 = vector.load %arg2[%c0, %c0_1] : memref<128x128xbf16, #tpu.memory_space<vmem>>, vector<128x128xbf16>
    %c0_2 = arith.constant 0 : index
    %c0_3 = arith.constant 0 : index
    %4 = vector.load %arg3[%c0_2, %c0_3] : memref<128x256xbf16, #tpu.memory_space<vmem>>, vector<128x256xbf16>
    %cst = arith.constant dense<0.000000e+00> : vector<128x256xf32>
    %5 = tpu.matmul %3, %4, %cst {dimension_numbers = #tpu.dot_dimension_numbers<[1], [0], [0], [1], [0, 0, 1, 1], [], []>} : vector<128x128xbf16>, vector<128x256xbf16>, vector<128x256xf32> -> vector<128x256xf32>
    %cst_4 = arith.constant 0.000000e+00 : f32
    %6 = vector.broadcast %cst_4 : f32 to vector<128x256xf32>
    %7 = arith.maximumf %5, %6 : vector<128x256xf32>
    %8 = arith.mulf %7, %7 : vector<128x256xf32>
    %c0_5 = arith.constant 0 : index
    %c0_6 = arith.constant 0 : index
    %9 = vector.load %arg6[%c0_5, %c0_6] : memref<128x128xf32, #tpu.memory_space<vmem>>, vector<128x128xf32>
    %10 = arith.truncf %8 : vector<128x256xf32> to vector<128x256xbf16>
    %c0_7 = arith.constant 0 : index
    %c0_8 = arith.constant 0 : index
    %11 = vector.load %arg4[%c0_7, %c0_8] : memref<256x128xbf16, #tpu.memory_space<vmem>>, vector<256x128xbf16>
    %cst_9 = arith.constant dense<0.000000e+00> : vector<128x128xf32>
    %12 = tpu.matmul %10, %11, %cst_9 {dimension_numbers = #tpu.dot_dimension_numbers<[1], [0], [0], [1], [0, 0, 1, 1], [], []>} : vector<128x256xbf16>, vector<256x128xbf16>, vector<128x128xf32> -> vector<128x128xf32>
    %13 = arith.addf %9, %12 : vector<128x128xf32>
    %c0_10 = arith.constant 0 : index
    %c0_11 = arith.constant 0 : index
    %14 = vector.load %arg6[%c0_10, %c0_11] : memref<128x128xf32, #tpu.memory_space<vmem>>, vector<128x128xf32>
    tpu.vector_store %arg6[%c0_10, %c0_11], %13 {strides = array<i32>} : memref<128x128xf32, #tpu.memory_space<vmem>>, vector<128x128xf32>,
    %c0_i32_12 = arith.constant 0 : i32
    %15 = arith.cmpi eq, %arg1, %c0_i32_12 : i32
    %16 = arith.extui %15 : i1 to i32
    %c0_i32_13 = arith.constant 0 : i32
    %17 = arith.cmpi ne, %16, %c0_i32_13 : i32
    scf.if %17 {
      %c0_14 = arith.constant 0 : index
      %c0_15 = arith.constant 0 : index
      %18 = vector.load %arg6[%c0_14, %c0_15] : memref<128x128xf32, #tpu.memory_space<vmem>>, vector<128x128xf32>
      %c0_16 = arith.constant 0 : index
      %c0_17 = arith.constant 0 : index
      %19 = vector.load %arg5[%c0_16, %c0_17] : memref<128x128xf32, #tpu.memory_space<vmem>>, vector<128x128xf32>
      tpu.vector_store %arg5[%c0_16, %c0_17], %18 {strides = array<i32>} : memref<128x128xf32, #tpu.memory_space<vmem>>, vector<128x128xf32>,
    } else {
    }
    return
  }
  func.func @transform_0(%arg0: i32, %arg1: i32) -> (i32, i32) {
    %c0_i32 = arith.constant 0 : i32
    %c0_i32_0 = arith.constant 0 : i32
    return %arg0, %c0_i32 : i32, i32
  }
  func.func @transform_1(%arg0: i32, %arg1: i32) -> (i32, i32) {
    %c0_i32 = arith.constant 0 : i32
    %c0_i32_0 = arith.constant 0 : i32
    return %c0_i32, %arg1 : i32, i32
  }
  func.func @transform_2(%arg0: i32, %arg1: i32) -> (i32, i32) {
    %c0_i32 = arith.constant 0 : i32
    %c0_i32_0 = arith.constant 0 : i32
    return %arg1, %c0_i32 : i32, i32
  }
  func.func @transform_3(%arg0: i32, %arg1: i32) -> (i32, i32) {
    %c0_i32 = arith.constant 0 : i32
    %c0_i32_0 = arith.constant 0 : i32
    return %arg0, %c0_i32 : i32, i32
  }
}

</mosaic_0001>

<llo_original>
// kernel: feed_forward.1
$region0: #{feed_forward.1}
  #allocation0 [shape = 'u32[]', space=smem, size = 0x4, offset = 0x4, fixed_abs, tag = 'smem constant byte address 0x4 - core index']
  #allocation1 [shape = 'u32[144,128]{1,0:T(1,128)}', space=vmem, size = 0x12000, scoped, tag = 'internal scratch']
  #allocation2 [shape = 'f32[128,128]{1,0:T(8,128)}', space=vmem, size = 0x10000, scoped, tag = 'scratch operand']
  %s0 = inlined_call_operand.vmem [shape: bf16[128,128], index: 0, kind: input, shape index: {}]
  %s1 = inlined_call_operand.vmem [shape: bf16[128,256], index: 1, kind: input, shape index: {}]
  %s2 = inlined_call_operand.vmem [shape: bf16[256,128], index: 2, kind: input, shape index: {}]
  %s3 = inlined_call_operand.vmem [shape: f32[128,128], index: 3, kind: output, shape index: {}]
  %s4 = sld [smem:[#allocation0]]
  $region30: #{feed_forward.1} parent=0
    _
  %s6 = ssub.s32 1, %s4
  %s7 = scalar_select 0, %s6, %s4
  // Predicated region
  $region2: #{feed_forward.1} parent=0 // pred_check
    _
  $region3: #{feed_forward.1} parent=0 // pred_check_branch
    %9 = sbr.rel (0) target = $region5
  $region4: #{feed_forward.1} parent=0 // pred_region
    _
  $region5: #{feed_forward.1} parent=0 // pred_fallthru
    _
  // Predicated region
  $region6: #{feed_forward.1} parent=0 // pred_check
    _
  $region7: #{feed_forward.1} parent=0 // pred_check_branch
    %11 = sbr.rel (0) target = $region9
  $region8: #{feed_forward.1} parent=0 // pred_region
    _
  $region9: #{feed_forward.1} parent=0 // pred_fallthru
    _
  // Predicated region
  $region10: #{feed_forward.1} parent=0 // pred_check
    _
  $region11: #{feed_forward.1} parent=0 // pred_check_branch
    %13 = sbr.rel (0) target = $region13
  $region12: #{feed_forward.1} parent=0 // pred_region
    _
  $region13: #{feed_forward.1} parent=0 // pred_fallthru
    _
  %p15 = scmp.eq.s32.totalorder 0, 0
  // Predicated region
  $region14: #{feed_forward.1} parent=0 // pred_check
    %p16 = pneg %p15
  $region15: #{feed_forward.1} parent=0 // pred_check_branch
    %18 = sbr.rel (%p16) target = $region17
  $region16: #{feed_forward.1} parent=0 // pred_region
    %19 = vst [vmem:[#allocation2] sm:$0xff] 0.0
    %20 = vst [vmem:[#allocation2 + $0x8] sm:$0xff] 0.0
    %21 = vst [vmem:[#allocation2 + $0x10] sm:$0xff] 0.0
    %22 = vst [vmem:[#allocation2 + $0x18] sm:$0xff] 0.0
    %23 = vst [vmem:[#allocation2 + $0x20] sm:$0xff] 0.0
    %24 = vst [vmem:[#allocation2 + $0x28] sm:$0xff] 0.0
    %25 = vst [vmem:[#allocation2 + $0x30] sm:$0xff] 0.0
    %26 = vst [vmem:[#allocation2 + $0x38] sm:$0xff] 0.0
    %27 = vst [vmem:[#allocation2 + $0x40] sm:$0xff] 0.0
    %28 = vst [vmem:[#allocation2 + $0x48] sm:$0xff] 0.0
    %29 = vst [vmem:[#allocation2 + $0x50] sm:$0xff] 0.0
    %30 = vst [vmem:[#allocation2 + $0x58] sm:$0xff] 0.0
    %31 = vst [vmem:[#allocation2 + $0x60] sm:$0xff] 0.0
    %32 = vst [vmem:[#allocation2 + $0x68] sm:$0xff] 0.0
    %33 = vst [vmem:[#allocation2 + $0x70] sm:$0xff] 0.0
    %34 = vst [vmem:[#allocation2 + $0x78] sm:$0xff] 0.0
  $region17: #{feed_forward.1} parent=0 // pred_fallthru
    _
  %v35 = vld [vmem:[%s0] sm:$0xf]
  %v36 = vld [vmem:[%s0 + $0x4] sm:$0xf]
  %v37 = vld [vmem:[%s0 + $0x8] sm:$0xf]
  %v38 = vld [vmem:[%s0 + $0xc] sm:$0xf]
  %v39 = vld [vmem:[%s0 + $0x10] sm:$0xf]
  %v40 = vld [vmem:[%s0 + $0x14] sm:$0xf]
  %v41 = vld [vmem:[%s0 + $0x18] sm:$0xf]
  %v42 = vld [vmem:[%s0 + $0x1c] sm:$0xf]
  %v43 = vld [vmem:[%s0 + $0x20] sm:$0xf]
  %v44 = vld [vmem:[%s0 + $0x24] sm:$0xf]
  %v45 = vld [vmem:[%s0 + $0x28] sm:$0xf]
  %v46 = vld [vmem:[%s0 + $0x2c] sm:$0xf]
  %v47 = vld [vmem:[%s0 + $0x30] sm:$0xf]
  %v48 = vld [vmem:[%s0 + $0x34] sm:$0xf]
  %v49 = vld [vmem:[%s0 + $0x38] sm:$0xf]
  %v50 = vld [vmem:[%s0 + $0x3c] sm:$0xf]
  %v51 = vld [vmem:[%s1] sm:$0xff]
  %v52 = vld [vmem:[%s1 + $0x8] sm:$0xff]
  %v53 = vld [vmem:[%s1 + $0x10] sm:$0xff]
  %v54 = vld [vmem:[%s1 + $0x18] sm:$0xff]
  %v55 = vld [vmem:[%s1 + $0x20] sm:$0xff]
  %v56 = vld [vmem:[%s1 + $0x28] sm:$0xff]
  %v57 = vld [vmem:[%s1 + $0x30] sm:$0xff]
  %v58 = vld [vmem:[%s1 + $0x38] sm:$0xff]
  %v59 = vld [vmem:[%s1 + $0x40] sm:$0xff]
  %v60 = vld [vmem:[%s1 + $0x48] sm:$0xff]
  %v61 = vld [vmem:[%s1 + $0x50] sm:$0xff]
  %v62 = vld [vmem:[%s1 + $0x58] sm:$0xff]
  %v63 = vld [vmem:[%s1 + $0x60] sm:$0xff]
  %v64 = vld [vmem:[%s1 + $0x68] sm:$0xff]
  %v65 = vld [vmem:[%s1 + $0x70] sm:$0xff]
  %v66 = vld [vmem:[%s1 + $0x78] sm:$0xff]
  %v83 = vunpack.c.l.b16 %v35
  %v84 = vunpack.c.l.b16 %v36
  %v85 = vunpack.c.l.b16 %v37
  %v86 = vunpack.c.l.b16 %v38
  %v87 = vunpack.c.l.b16 %v39
  %v88 = vunpack.c.l.b16 %v40
  %v89 = vunpack.c.l.b16 %v41
  %v90 = vunpack.c.l.b16 %v42
  %v91 = vunpack.c.l.b16 %v43
  %v92 = vunpack.c.l.b16 %v44
  %v93 = vunpack.c.l.b16 %v45
  %v94 = vunpack.c.l.b16 %v46
  %v95 = vunpack.c.l.b16 %v47
  %v96 = vunpack.c.l.b16 %v48
  %v97 = vunpack.c.l.b16 %v49
  %v98 = vunpack.c.l.b16 %v50
  %v99 = vpack.c.b16 %v84, %v83
  %v100 = vpack.c.b16 %v86, %v85
  %v101 = vpack.c.b16 %v88, %v87
  %v102 = vpack.c.b16 %v90, %v89
  %v103 = vpack.c.b16 %v92, %v91
  %v104 = vpack.c.b16 %v94, %v93
  %v105 = vpack.c.b16 %v96, %v95
  %v106 = vpack.c.b16 %v98, %v97
  %v131 = vunpack.c.l.b16 %v51
  %v132 = vunpack.c.h.b16 %v51
  %v133 = vunpack.c.l.b16 %v52
  %v134 = vunpack.c.h.b16 %v52
  %v135 = vunpack.c.l.b16 %v53
  %v136 = vunpack.c.h.b16 %v53
  %v137 = vunpack.c.l.b16 %v54
  %v138 = vunpack.c.h.b16 %v54
  %v139 = vunpack.c.l.b16 %v55
  %v140 = vunpack.c.h.b16 %v55
  %v141 = vunpack.c.l.b16 %v56
  %v142 = vunpack.c.h.b16 %v56
  %v143 = vunpack.c.l.b16 %v57
  %v144 = vunpack.c.h.b16 %v57
  %v145 = vunpack.c.l.b16 %v58
  %v146 = vunpack.c.h.b16 %v58
  %v147 = vunpack.c.l.b16 %v59
  %v148 = vunpack.c.h.b16 %v59
  %v149 = vunpack.c.l.b16 %v60
  %v150 = vunpack.c.h.b16 %v60
  %v151 = vunpack.c.l.b16 %v61
  %v152 = vunpack.c.h.b16 %v61
  %v153 = vunpack.c.l.b16 %v62
  %v154 = vunpack.c.h.b16 %v62
  %v155 = vunpack.c.l.b16 %v63
  %v156 = vunpack.c.h.b16 %v63
  %v157 = vunpack.c.l.b16 %v64
  %v158 = vunpack.c.h.b16 %v64
  %v159 = vunpack.c.l.b16 %v65
  %v160 = vunpack.c.h.b16 %v65
  %v161 = vunpack.c.l.b16 %v66
  %v162 = vunpack.c.h.b16 %v66
  %v163 = vpack.c.b16 %v133, %v131
  %v164 = vpack.c.b16 %v134, %v132
  %v165 = vpack.c.b16 %v137, %v135
  %v166 = vpack.c.b16 %v138, %v136
  %v167 = vpack.c.b16 %v141, %v139
  %v168 = vpack.c.b16 %v142, %v140
  %v169 = vpack.c.b16 %v145, %v143
  %v170 = vpack.c.b16 %v146, %v144
  %v171 = vpack.c.b16 %v149, %v147
  %v172 = vpack.c.b16 %v150, %v148
  %v173 = vpack.c.b16 %v153, %v151
  %v174 = vpack.c.b16 %v154, %v152
  %v175 = vpack.c.b16 %v157, %v155
  %v176 = vpack.c.b16 %v158, %v156
  %v177 = vpack.c.b16 %v161, %v159
  %v178 = vpack.c.b16 %v162, %v160
  %195 = vmatprep.subr.bf16.mxu0 %v164
  %196 = vmatpush1.bf16.msra.mxu0 %v163
  %197 = vmatprep.subr.bf16.mxu0 %v166
  %198 = vmatpush1.bf16.msra.mxu0 %v165
  %199 = vmatprep.subr.bf16.mxu0 %v168
  %200 = vmatpush1.bf16.msra.mxu0 %v167
  %201 = vmatprep.subr.bf16.mxu0 %v170
  %202 = vmatpush1.bf16.msra.mxu0 %v169
  %203 = vmatprep.subr.bf16.mxu0 %v172
  %204 = vmatpush1.bf16.msra.mxu0 %v171
  %205 = vmatprep.subr.bf16.mxu0 %v174
  %206 = vmatpush1.bf16.msra.mxu0 %v173
  %207 = vmatprep.subr.bf16.mxu0 %v176
  %208 = vmatpush1.bf16.msra.mxu0 %v175
  %209 = vmatprep.subr.bf16.mxu0 %v178
  %210 = vmatpush1.bf16.msra.mxu0 %v177
  %211 = vmatprep.subr.bf16.mxu0 0
  %212 = vmatpush1.bf16.msra.mxu0 0
  %213 = vmatprep.subr.bf16.mxu0 0
  %214 = vmatpush1.bf16.msra.mxu0 0
  %215 = vmatprep.subr.bf16.mxu0 0
  %216 = vmatpush1.bf16.msra.mxu0 0
  %217 = vmatprep.subr.bf16.mxu0 0
  %218 = vmatpush1.bf16.msra.mxu0 0
  %219 = vmatprep.subr.bf16.mxu0 0
  %220 = vmatpush1.bf16.msra.mxu0 0
  %221 = vmatprep.subr.bf16.mxu0 0
  %222 = vmatpush1.bf16.msra.mxu0 0
  %223 = vmatprep.subr.bf16.mxu0 0
  %224 = vmatpush1.bf16.msra.mxu0 0
  %225 = vmatprep.subr.bf16.mxu0 0
  %226 = vmatpush1.bf16.msra.mxu0 0
  %227 = vmatprep.mubr.bf16.mxu0 0
  %228 = vmatmul.mubr.bf16.gmra.mrb[0].mxu0 %v99
  %v229 = vpop.f32.mrb[0].mxu0
  %v230 = vadd.f32 0.0, %v229
  %v231 = vpop.f32.mrb[0].mxu0
  %v232 = vadd.f32 0.0, %v231
  %v233 = vpop.f32.mrb[0].mxu0
  %v234 = vadd.f32 0.0, %v233
  %v235 = vpop.f32.mrb[0].mxu0
  %v236 = vadd.f32 0.0, %v235
  %237 = vmatprep.mubr.bf16.mxu0 0
  %238 = vmatmul.mubr.bf16.gmra.mrb[0].mxu0 %v100
  %v239 = vpop.f32.mrb[0].mxu0
  %v240 = vadd.f32 0.0, %v239
  %v241 = vpop.f32.mrb[0].mxu0
  %v242 = vadd.f32 0.0, %v241
  %v243 = vpop.f32.mrb[0].mxu0
  %v244 = vadd.f32 0.0, %v243
  %v245 = vpop.f32.mrb[0].mxu0
  %v246 = vadd.f32 0.0, %v245
  %247 = vmatprep.mubr.bf16.mxu0 0
  %248 = vmatmul.mubr.bf16.gmra.mrb[0].mxu0 %v101
  %v249 = vpop.f32.mrb[0].mxu0
  %v250 = vadd.f32 0.0, %v249
  %v251 = vpop.f32.mrb[0].mxu0
  %v252 = vadd.f32 0.0, %v251
  %v253 = vpop.f32.mrb[0].mxu0
  %v254 = vadd.f32 0.0, %v253
  %v255 = vpop.f32.mrb[0].mxu0
  %v256 = vadd.f32 0.0, %v255
  %257 = vmatprep.mubr.bf16.mxu0 0
  %258 = vmatmul.mubr.bf16.gmra.mrb[0].mxu0 %v102
  %v259 = vpop.f32.mrb[0].mxu0
  %v260 = vadd.f32 0.0, %v259
  %v261 = vpop.f32.mrb[0].mxu0
  %v262 = vadd.f32 0.0, %v261
  %v263 = vpop.f32.mrb[0].mxu0
  %v264 = vadd.f32 0.0, %v263
  %v265 = vpop.f32.mrb[0].mxu0
  %v266 = vadd.f32 0.0, %v265
  %267 = vmatprep.mubr.bf16.mxu0 0
  %268 = vmatmul.mubr.bf16.gmra.mrb[0].mxu0 %v103
  %v269 = vpop.f32.mrb[0].mxu0
  %v270 = vadd.f32 0.0, %v269
  %v271 = vpop.f32.mrb[0].mxu0
  %v272 = vadd.f32 0.0, %v271
  %v273 = vpop.f32.mrb[0].mxu0
  %v274 = vadd.f32 0.0, %v273
  %v275 = vpop.f32.mrb[0].mxu0
  %v276 = vadd.f32 0.0, %v275
  %277 = vmatprep.mubr.bf16.mxu0 0
  %278 = vmatmul.mubr.bf16.gmra.mrb[0].mxu0 %v104
  %v279 = vpop.f32.mrb[0].mxu0
  %v280 = vadd.f32 0.0, %v279
  %v281 = vpop.f32.mrb[0].mxu0
  %v282 = vadd.f32 0.0, %v281
  %v283 = vpop.f32.mrb[0].mxu0
  %v284 = vadd.f32 0.0, %v283
  %v285 = vpop.f32.mrb[0].mxu0
  %v286 = vadd.f32 0.0, %v285
  %287 = vmatprep.mubr.bf16.mxu0 0
  %288 = vmatmul.mubr.bf16.gmra.mrb[0].mxu0 %v105
  %v289 = vpop.f32.mrb[0].mxu0
  %v290 = vadd.f32 0.0, %v289
  %v291 = vpop.f32.mrb[0].mxu0
  %v292 = vadd.f32 0.0, %v291
  %v293 = vpop.f32.mrb[0].mxu0
  %v294 = vadd.f32 0.0, %v293
  %v295 = vpop.f32.mrb[0].mxu0
  %v296 = vadd.f32 0.0, %v295
  %297 = vmatprep.mubr.bf16.mxu0 0
  %298 = vmatmul.mubr.bf16.gmra.mrb[0].mxu0 %v106
  %v299 = vpop.f32.mrb[0].mxu0
  %v300 = vadd.f32 0.0, %v299
  %v301 = vpop.f32.mrb[0].mxu0
  %v302 = vadd.f32 0.0, %v301
  %v303 = vpop.f32.mrb[0].mxu0
  %v304 = vadd.f32 0.0, %v303
  %v305 = vpop.f32.mrb[0].mxu0
  %v306 = vadd.f32 0.0, %v305
  %307 = vdwg.mxu0
  %v308 = vmax.f32 %v230, 0.0
  %v309 = vmax.f32 %v232, 0.0
  %v310 = vmax.f32 %v234, 0.0
  %v311 = vmax.f32 %v236, 0.0
  %v312 = vmax.f32 %v240, 0.0
  %v313 = vmax.f32 %v242, 0.0
  %v314 = vmax.f32 %v244, 0.0
  %v315 = vmax.f32 %v246, 0.0
  %v316 = vmax.f32 %v250, 0.0
  %v317 = vmax.f32 %v252, 0.0
  %v318 = vmax.f32 %v254, 0.0
  %v319 = vmax.f32 %v256, 0.0
  %v320 = vmax.f32 %v260, 0.0
  %v321 = vmax.f32 %v262, 0.0
  %v322 = vmax.f32 %v264, 0.0
  %v323 = vmax.f32 %v266, 0.0
  %v324 = vmax.f32 %v270, 0.0
  %v325 = vmax.f32 %v272, 0.0
  %v326 = vmax.f32 %v274, 0.0
  %v327 = vmax.f32 %v276, 0.0
  %v328 = vmax.f32 %v280, 0.0
  %v329 = vmax.f32 %v282, 0.0
  %v330 = vmax.f32 %v284, 0.0
  %v331 = vmax.f32 %v286, 0.0
  %v332 = vmax.f32 %v290, 0.0
  %v333 = vmax.f32 %v292, 0.0
  %v334 = vmax.f32 %v294, 0.0
  %v335 = vmax.f32 %v296, 0.0
  %v336 = vmax.f32 %v300, 0.0
  %v337 = vmax.f32 %v302, 0.0
  %v338 = vmax.f32 %v304, 0.0
  %v339 = vmax.f32 %v306, 0.0
  %v340 = vmul.f32 %v308, %v308
  %v341 = vmul.f32 %v309, %v309
  %v342 = vmul.f32 %v310, %v310
  %v343 = vmul.f32 %v311, %v311
  %v344 = vmul.f32 %v312, %v312
  %v345 = vmul.f32 %v313, %v313
  %v346 = vmul.f32 %v314, %v314
  %v347 = vmul.f32 %v315, %v315
  %v348 = vmul.f32 %v316, %v316
  %v349 = vmul.f32 %v317, %v317
  %v350 = vmul.f32 %v318, %v318
  %v351 = vmul.f32 %v319, %v319
  %v352 = vmul.f32 %v320, %v320
  %v353 = vmul.f32 %v321, %v321
  %v354 = vmul.f32 %v322, %v322
  %v355 = vmul.f32 %v323, %v323
  %v356 = vmul.f32 %v324, %v324
  %v357 = vmul.f32 %v325, %v325
  %v358 = vmul.f32 %v326, %v326
  %v359 = vmul.f32 %v327, %v327
  %v360 = vmul.f32 %v328, %v328
  %v361 = vmul.f32 %v329, %v329
  %v362 = vmul.f32 %v330, %v330
  %v363 = vmul.f32 %v331, %v331
  %v364 = vmul.f32 %v332, %v332
  %v365 = vmul.f32 %v333, %v333
  %v366 = vmul.f32 %v334, %v334
  %v367 = vmul.f32 %v335, %v335
  %v368 = vmul.f32 %v336, %v336
  %v369 = vmul.f32 %v337, %v337
  %v370 = vmul.f32 %v338, %v338
  %v371 = vmul.f32 %v339, %v339
  %v372 = vld [vmem:[#allocation2] sm:$0xff]
  %v373 = vld [vmem:[#allocation2 + $0x8] sm:$0xff]
  %v374 = vld [vmem:[#allocation2 + $0x10] sm:$0xff]
  %v375 = vld [vmem:[#allocation2 + $0x18] sm:$0xff]
  %v376 = vld [vmem:[#allocation2 + $0x20] sm:$0xff]
  %v377 = vld [vmem:[#allocation2 + $0x28] sm:$0xff]
  %v378 = vld [vmem:[#allocation2 + $0x30] sm:$0xff]
  %v379 = vld [vmem:[#allocation2 + $0x38] sm:$0xff]
  %v380 = vld [vmem:[#allocation2 + $0x40] sm:$0xff]
  %v381 = vld [vmem:[#allocation2 + $0x48] sm:$0xff]
  %v382 = vld [vmem:[#allocation2 + $0x50] sm:$0xff]
  %v383 = vld [vmem:[#allocation2 + $0x58] sm:$0xff]
  %v384 = vld [vmem:[#allocation2 + $0x60] sm:$0xff]
  %v385 = vld [vmem:[#allocation2 + $0x68] sm:$0xff]
  %v386 = vld [vmem:[#allocation2 + $0x70] sm:$0xff]
  %v387 = vld [vmem:[#allocation2 + $0x78] sm:$0xff]
  %v388 = vpack.c.bf16 %v342, %v340
  %v389 = vpack.c.bf16 %v343, %v341
  %v390 = vpack.c.bf16 %v346, %v344
  %v391 = vpack.c.bf16 %v347, %v345
  %v392 = vpack.c.bf16 %v350, %v348
  %v393 = vpack.c.bf16 %v351, %v349
  %v394 = vpack.c.bf16 %v354, %v352
  %v395 = vpack.c.bf16 %v355, %v353
  %v396 = vpack.c.bf16 %v358, %v356
  %v397 = vpack.c.bf16 %v359, %v357
  %v398 = vpack.c.bf16 %v362, %v360
  %v399 = vpack.c.bf16 %v363, %v361
  %v400 = vpack.c.bf16 %v366, %v364
  %v401 = vpack.c.bf16 %v367, %v365
  %v402 = vpack.c.bf16 %v370, %v368
  %v403 = vpack.c.bf16 %v371, %v369
  %v404 = vld [vmem:[%s2] sm:$0xf]
  %v405 = vld [vmem:[%s2 + $0x4] sm:$0xf]
  %v406 = vld [vmem:[%s2 + $0x8] sm:$0xf]
  %v407 = vld [vmem:[%s2 + $0xc] sm:$0xf]
  %v408 = vld [vmem:[%s2 + $0x10] sm:$0xf]
  %v409 = vld [vmem:[%s2 + $0x14] sm:$0xf]
  %v410 = vld [vmem:[%s2 + $0x18] sm:$0xf]
  %v411 = vld [vmem:[%s2 + $0x1c] sm:$0xf]
  %v412 = vld [vmem:[%s2 + $0x20] sm:$0xf]
  %v413 = vld [vmem:[%s2 + $0x24] sm:$0xf]
  %v414 = vld [vmem:[%s2 + $0x28] sm:$0xf]
  %v415 = vld [vmem:[%s2 + $0x2c] sm:$0xf]
  %v416 = vld [vmem:[%s2 + $0x30] sm:$0xf]
  %v417 = vld [vmem:[%s2 + $0x34] sm:$0xf]
  %v418 = vld [vmem:[%s2 + $0x38] sm:$0xf]
  %v419 = vld [vmem:[%s2 + $0x3c] sm:$0xf]
  %v420 = vld [vmem:[%s2 + $0x40] sm:$0xf]
  %v421 = vld [vmem:[%s2 + $0x44] sm:$0xf]
  %v422 = vld [vmem:[%s2 + $0x48] sm:$0xf]
  %v423 = vld [vmem:[%s2 + $0x4c] sm:$0xf]
  %v424 = vld [vmem:[%s2 + $0x50] sm:$0xf]
  %v425 = vld [vmem:[%s2 + $0x54] sm:$0xf]
  %v426 = vld [vmem:[%s2 + $0x58] sm:$0xf]
  %v427 = vld [vmem:[%s2 + $0x5c] sm:$0xf]
  %v428 = vld [vmem:[%s2 + $0x60] sm:$0xf]
  %v429 = vld [vmem:[%s2 + $0x64] sm:$0xf]
  %v430 = vld [vmem:[%s2 + $0x68] sm:$0xf]
  %v431 = vld [vmem:[%s2 + $0x6c] sm:$0xf]
  %v432 = vld [vmem:[%s2 + $0x70] sm:$0xf]
  %v433 = vld [vmem:[%s2 + $0x74] sm:$0xf]
  %v434 = vld [vmem:[%s2 + $0x78] sm:$0xf]
  %v435 = vld [vmem:[%s2 + $0x7c] sm:$0xf]
  %v468 = vunpack.c.l.b16 %v404
  %v469 = vunpack.c.l.b16 %v405
  %v470 = vunpack.c.l.b16 %v406
  %v471 = vunpack.c.l.b16 %v407
  %v472 = vunpack.c.l.b16 %v408
  %v473 = vunpack.c.l.b16 %v409
  %v474 = vunpack.c.l.b16 %v410
  %v475 = vunpack.c.l.b16 %v411
  %v476 = vunpack.c.l.b16 %v412
  %v477 = vunpack.c.l.b16 %v413
  %v478 = vunpack.c.l.b16 %v414
  %v479 = vunpack.c.l.b16 %v415
  %v480 = vunpack.c.l.b16 %v416
  %v481 = vunpack.c.l.b16 %v417
  %v482 = vunpack.c.l.b16 %v418
  %v483 = vunpack.c.l.b16 %v419
  %v484 = vunpack.c.l.b16 %v420
  %v485 = vunpack.c.l.b16 %v421
  %v486 = vunpack.c.l.b16 %v422
  %v487 = vunpack.c.l.b16 %v423
  %v488 = vunpack.c.l.b16 %v424
  %v489 = vunpack.c.l.b16 %v425
  %v490 = vunpack.c.l.b16 %v426
  %v491 = vunpack.c.l.b16 %v427
  %v492 = vunpack.c.l.b16 %v428
  %v493 = vunpack.c.l.b16 %v429
  %v494 = vunpack.c.l.b16 %v430
  %v495 = vunpack.c.l.b16 %v431
  %v496 = vunpack.c.l.b16 %v432
  %v497 = vunpack.c.l.b16 %v433
  %v498 = vunpack.c.l.b16 %v434
  %v499 = vunpack.c.l.b16 %v435
  %v500 = vpack.c.b16 %v469, %v468
  %v501 = vpack.c.b16 %v471, %v470
  %v502 = vpack.c.b16 %v473, %v472
  %v503 = vpack.c.b16 %v475, %v474
  %v504 = vpack.c.b16 %v477, %v476
  %v505 = vpack.c.b16 %v479, %v478
  %v506 = vpack.c.b16 %v481, %v480
  %v507 = vpack.c.b16 %v483, %v482
  %v508 = vpack.c.b16 %v485, %v484
  %v509 = vpack.c.b16 %v487, %v486
  %v510 = vpack.c.b16 %v489, %v488
  %v511 = vpack.c.b16 %v491, %v490
  %v512 = vpack.c.b16 %v493, %v492
  %v513 = vpack.c.b16 %v495, %v494
  %v514 = vpack.c.b16 %v497, %v496
  %v515 = vpack.c.b16 %v499, %v498
  %532 = vmatprep.subr.bf16.mxu0 0
  %533 = vmatpush1.bf16.msra.mxu0 %v500
  %534 = vmatprep.subr.bf16.mxu0 0
  %535 = vmatpush1.bf16.msra.mxu0 %v501
  %536 = vmatprep.subr.bf16.mxu0 0
  %537 = vmatpush1.bf16.msra.mxu0 %v502
  %538 = vmatprep.subr.bf16.mxu0 0
  %539 = vmatpush1.bf16.msra.mxu0 %v503
  %540 = vmatprep.subr.bf16.mxu0 0
  %541 = vmatpush1.bf16.msra.mxu0 %v504
  %542 = vmatprep.subr.bf16.mxu0 0
  %543 = vmatpush1.bf16.msra.mxu0 %v505
  %544 = vmatprep.subr.bf16.mxu0 0
  %545 = vmatpush1.bf16.msra.mxu0 %v506
  %546 = vmatprep.subr.bf16.mxu0 0
  %547 = vmatpush1.bf16.msra.mxu0 %v507
  %548 = vmatprep.subr.bf16.mxu0 0
  %549 = vmatpush1.bf16.msra.mxu0 %v508
  %550 = vmatprep.subr.bf16.mxu0 0
  %551 = vmatpush1.bf16.msra.mxu0 %v509
  %552 = vmatprep.subr.bf16.mxu0 0
  %553 = vmatpush1.bf16.msra.mxu0 %v510
  %554 = vmatprep.subr.bf16.mxu0 0
  %555 = vmatpush1.bf16.msra.mxu0 %v511
  %556 = vmatprep.subr.bf16.mxu0 0
  %557 = vmatpush1.bf16.msra.mxu0 %v512
  %558 = vmatprep.subr.bf16.mxu0 0
  %559 = vmatpush1.bf16.msra.mxu0 %v513
  %560 = vmatprep.subr.bf16.mxu0 0
  %561 = vmatpush1.bf16.msra.mxu0 %v514
  %562 = vmatprep.subr.bf16.mxu0 0
  %563 = vmatpush1.bf16.msra.mxu0 %v515
  %564 = vmatprep.mubr.bf16.mxu0 %v389
  %565 = vmatmul.mubr.bf16.gmra.mrb[0].mxu0 %v388
  %v566 = vpop.f32.mrb[0].mxu0
  %v567 = vadd.f32 0.0, %v566
  %v568 = vpop.f32.mrb[0].mxu0
  %v569 = vpop.f32.mrb[0].mxu0
  %v570 = vadd.f32 0.0, %v569
  %v571 = vpop.f32.mrb[0].mxu0
  %572 = vmatprep.mubr.bf16.mxu0 %v391
  %573 = vmatmul.mubr.bf16.gmra.mrb[0].mxu0 %v390
  %v574 = vpop.f32.mrb[0].mxu0
  %v575 = vadd.f32 0.0, %v574
  %v576 = vpop.f32.mrb[0].mxu0
  %v577 = vpop.f32.mrb[0].mxu0
  %v578 = vadd.f32 0.0, %v577
  %v579 = vpop.f32.mrb[0].mxu0
  %580 = vmatprep.mubr.bf16.mxu0 %v393
  %581 = vmatmul.mubr.bf16.gmra.mrb[0].mxu0 %v392
  %v582 = vpop.f32.mrb[0].mxu0
  %v583 = vadd.f32 0.0, %v582
  %v584 = vpop.f32.mrb[0].mxu0
  %v585 = vpop.f32.mrb[0].mxu0
  %v586 = vadd.f32 0.0, %v585
  %v587 = vpop.f32.mrb[0].mxu0
  %588 = vmatprep.mubr.bf16.mxu0 %v395
  %589 = vmatmul.mubr.bf16.gmra.mrb[0].mxu0 %v394
  %v590 = vpop.f32.mrb[0].mxu0
  %v591 = vadd.f32 0.0, %v590
  %v592 = vpop.f32.mrb[0].mxu0
  %v593 = vpop.f32.mrb[0].mxu0
  %v594 = vadd.f32 0.0, %v593
  %v595 = vpop.f32.mrb[0].mxu0
  %596 = vmatprep.mubr.bf16.mxu0 %v397
  %597 = vmatmul.mubr.bf16.gmra.mrb[0].mxu0 %v396
  %v598 = vpop.f32.mrb[0].mxu0
  %v599 = vadd.f32 0.0, %v598
  %v600 = vpop.f32.mrb[0].mxu0
  %v601 = vpop.f32.mrb[0].mxu0
  %v602 = vadd.f32 0.0, %v601
  %v603 = vpop.f32.mrb[0].mxu0
  %604 = vmatprep.mubr.bf16.mxu0 %v399
  %605 = vmatmul.mubr.bf16.gmra.mrb[0].mxu0 %v398
  %v606 = vpop.f32.mrb[0].mxu0
  %v607 = vadd.f32 0.0, %v606
  %v608 = vpop.f32.mrb[0].mxu0
  %v609 = vpop.f32.mrb[0].mxu0
  %v610 = vadd.f32 0.0, %v609
  %v611 = vpop.f32.mrb[0].mxu0
  %612 = vmatprep.mubr.bf16.mxu0 %v401
  %613 = vmatmul.mubr.bf16.gmra.mrb[0].mxu0 %v400
  %v614 = vpop.f32.mrb[0].mxu0
  %v615 = vadd.f32 0.0, %v614
  %v616 = vpop.f32.mrb[0].mxu0
  %v617 = vpop.f32.mrb[0].mxu0
  %v618 = vadd.f32 0.0, %v617
  %v619 = vpop.f32.mrb[0].mxu0
  %620 = vmatprep.mubr.bf16.mxu0 %v403
  %621 = vmatmul.mubr.bf16.gmra.mrb[0].mxu0 %v402
  %v622 = vpop.f32.mrb[0].mxu0
  %v623 = vadd.f32 0.0, %v622
  %v624 = vpop.f32.mrb[0].mxu0
  %v625 = vpop.f32.mrb[0].mxu0
  %v626 = vadd.f32 0.0, %v625
  %v627 = vpop.f32.mrb[0].mxu0
  %628 = vdwg.mxu0
  %v629 = vadd.f32 %v372, %v567
  %v630 = vadd.f32 %v373, %v570
  %v631 = vadd.f32 %v374, %v575
  %v632 = vadd.f32 %v375, %v578
  %v633 = vadd.f32 %v376, %v583
  %v634 = vadd.f32 %v377, %v586
  %v635 = vadd.f32 %v378, %v591
  %v636 = vadd.f32 %v379, %v594
  %v637 = vadd.f32 %v380, %v599
  %v638 = vadd.f32 %v381, %v602
  %v639 = vadd.f32 %v382, %v607
  %v640 = vadd.f32 %v383, %v610
  %v641 = vadd.f32 %v384, %v615
  %v642 = vadd.f32 %v385, %v618
  %v643 = vadd.f32 %v386, %v623
  %v644 = vadd.f32 %v387, %v626
  %645 = vst [vmem:[#allocation2] sm:$0xff] %v629
  %646 = vst [vmem:[#allocation2 + $0x8] sm:$0xff] %v630
  %647 = vst [vmem:[#allocation2 + $0x10] sm:$0xff] %v631
  %648 = vst [vmem:[#allocation2 + $0x18] sm:$0xff] %v632
  %649 = vst [vmem:[#allocation2 + $0x20] sm:$0xff] %v633
  %650 = vst [vmem:[#allocation2 + $0x28] sm:$0xff] %v634
  %651 = vst [vmem:[#allocation2 + $0x30] sm:$0xff] %v635
  %652 = vst [vmem:[#allocation2 + $0x38] sm:$0xff] %v636
  %653 = vst [vmem:[#allocation2 + $0x40] sm:$0xff] %v637
  %654 = vst [vmem:[#allocation2 + $0x48] sm:$0xff] %v638
  %655 = vst [vmem:[#allocation2 + $0x50] sm:$0xff] %v639
  %656 = vst [vmem:[#allocation2 + $0x58] sm:$0xff] %v640
  %657 = vst [vmem:[#allocation2 + $0x60] sm:$0xff] %v641
  %658 = vst [vmem:[#allocation2 + $0x68] sm:$0xff] %v642
  %659 = vst [vmem:[#allocation2 + $0x70] sm:$0xff] %v643
  %660 = vst [vmem:[#allocation2 + $0x78] sm:$0xff] %v644
  // Predicated region
  $region18: #{feed_forward.1} parent=0 // pred_check
    %p661 = pneg %p15
  $region19: #{feed_forward.1} parent=0 // pred_check_branch
    %663 = sbr.rel (%p661) target = $region21
  $region20: #{feed_forward.1} parent=0 // pred_region
    %v664 = vld [vmem:[#allocation2] sm:$0xff]
    %v665 = vld [vmem:[#allocation2 + $0x8] sm:$0xff]
    %v666 = vld [vmem:[#allocation2 + $0x10] sm:$0xff]
    %v667 = vld [vmem:[#allocation2 + $0x18] sm:$0xff]
    %v668 = vld [vmem:[#allocation2 + $0x20] sm:$0xff]
    %v669 = vld [vmem:[#allocation2 + $0x28] sm:$0xff]
    %v670 = vld [vmem:[#allocation2 + $0x30] sm:$0xff]
    %v671 = vld [vmem:[#allocation2 + $0x38] sm:$0xff]
    %v672 = vld [vmem:[#allocation2 + $0x40] sm:$0xff]
    %v673 = vld [vmem:[#allocation2 + $0x48] sm:$0xff]
    %v674 = vld [vmem:[#allocation2 + $0x50] sm:$0xff]
    %v675 = vld [vmem:[#allocation2 + $0x58] sm:$0xff]
    %v676 = vld [vmem:[#allocation2 + $0x60] sm:$0xff]
    %v677 = vld [vmem:[#allocation2 + $0x68] sm:$0xff]
    %v678 = vld [vmem:[#allocation2 + $0x70] sm:$0xff]
    %v679 = vld [vmem:[#allocation2 + $0x78] sm:$0xff]
    %680 = vst [vmem:[%s3] sm:$0xff] %v664
    %681 = vst [vmem:[%s3 + $0x8] sm:$0xff] %v665
    %682 = vst [vmem:[%s3 + $0x10] sm:$0xff] %v666
    %683 = vst [vmem:[%s3 + $0x18] sm:$0xff] %v667
    %684 = vst [vmem:[%s3 + $0x20] sm:$0xff] %v668
    %685 = vst [vmem:[%s3 + $0x28] sm:$0xff] %v669
    %686 = vst [vmem:[%s3 + $0x30] sm:$0xff] %v670
    %687 = vst [vmem:[%s3 + $0x38] sm:$0xff] %v671
    %688 = vst [vmem:[%s3 + $0x40] sm:$0xff] %v672
    %689 = vst [vmem:[%s3 + $0x48] sm:$0xff] %v673
    %690 = vst [vmem:[%s3 + $0x50] sm:$0xff] %v674
    %691 = vst [vmem:[%s3 + $0x58] sm:$0xff] %v675
    %692 = vst [vmem:[%s3 + $0x60] sm:$0xff] %v676
    %693 = vst [vmem:[%s3 + $0x68] sm:$0xff] %v677
    %694 = vst [vmem:[%s3 + $0x70] sm:$0xff] %v678
    %695 = vst [vmem:[%s3 + $0x78] sm:$0xff] %v679
  $region21: #{feed_forward.1} parent=0 // pred_fallthru
    _
  // Predicated region
  $region22: #{feed_forward.1} parent=0 // pred_check
    _
  $region23: #{feed_forward.1} parent=0 // pred_check_branch
    %697 = sbr.rel (0) target = $region25
  $region24: #{feed_forward.1} parent=0 // pred_region
    _
  $region25: #{feed_forward.1} parent=0 // pred_fallthru
    _
  // Predicated region
  $region26: #{feed_forward.1} parent=0 // pred_check
    _
  $region27: #{feed_forward.1} parent=0 // pred_check_branch
    %699 = sbr.rel (0) target = $region29
  $region28: #{feed_forward.1} parent=0 // pred_region
    _
  $region29: #{feed_forward.1} parent=0 // pred_fallthru
    _

</llo_original>
